<compile_context>
chip_gen: v5e
topology: v5e:2x2
jax: 0.10.0
libtpu: 0.0.40
codegen_flags: <defaults>
</compile_context>

<pallas_src>
import jax
import jax.numpy as jnp
from jax import lax
from jax.experimental import pallas as pl
from jax.experimental.pallas import tpu as pltpu


def _cdiv(a, b):
    return -(-a // b)


def _round_up(x, m):
    return _cdiv(x, m) * m


def _pick_tn(c, max_tn):
    """Lane tile for the channel axis: full C if C < 128, else the largest
    multiple of 128 <= max_tn that divides round_up(C, 128)."""
    if c < 128:
        return c
    c128 = _round_up(c, 128)
    best = 128
    m = 256
    while m <= min(max_tn, c128):
        if c128 % m == 0:
            best = m
        m += 128
    return best


def _static_gconv_kernel(a_ref, x_ref, o_ref):
    # a_ref: (H, W)       adjacency, VMEM-resident across all grid steps
    # x_ref: (BT, W, TN)  BT batch slices of one channel lane-tile
    # o_ref: (BT, H, TN)
    a = a_ref[...]
    bt = x_ref.shape[0]

    def body(b, carry):
        o_ref[b] = jnp.dot(
            a, x_ref[b], preferred_element_type=jnp.float32
        ).astype(o_ref.dtype)
        return carry

    lax.fori_loop(0, bt, body, 0, unroll=min(8, bt))


def static_gconv(A, x, *, max_tn=512, max_bt=64,
                 tile_budget_bytes=40 << 20, vmem_limit_bytes=48 << 20):
    """A: (H, W), x: (B, W, C) -> (B, H, C).  einsum('hw,bwc->bhc', A, x)."""
    H, W = A.shape
    B, W2, C = x.shape
    assert W == W2, "A second dim must match x node dim"

    itemsize = jnp.dtype(x.dtype).itemsize
    a_itemsize = jnp.dtype(A.dtype).itemsize

    # Channel lane tile (no channel padding copies; tails are masked by Pallas).
    tn = _pick_tn(C, max_tn)

    # Batches per grid step from the full double-buffered footprint.
    # TODO(synk): for very large graphs (2*H*W*itemsize approaching the VMEM
    # budget) add a third "arbitrary" grid axis over W with an f32 accumulator
    # instead of keeping all of A resident.
    a_bytes = 2 * H * W * a_itemsize
    per_batch_bytes = 2 * (W + H) * tn * itemsize
    bt_cap = max(1, (tile_budget_bytes - a_bytes) // per_batch_bytes)
    bt = int(max(1, min(max_bt, B, bt_cap)))

    grid_b = _cdiv(B, bt)
    grid_c = _cdiv(C, tn)
    # v7x megacore: ensure >= 2 parallel grid steps when possible so both
    # TensorCores get work (measured ~no impact on 1-TC v5e/v6e).
    if grid_b * grid_c < 2 and B >= 2:
        bt = _cdiv(B, 2)
        grid_b = _cdiv(B, bt)

    grid = (grid_b, grid_c)

    cost = pl.CostEstimate(
        flops=2 * B * H * W * C,
        transcendentals=0,
        bytes_accessed=a_itemsize * H * W + itemsize * (B * W * C + B * H * C),
    )

    return pl.pallas_call(
        _static_gconv_kernel,
        out_shape=jax.ShapeDtypeStruct((B, H, C), x.dtype),
        grid_spec=pltpu.PrefetchScalarGridSpec(
            num_scalar_prefetch=0,
            grid=grid,
            in_specs=[
                pl.BlockSpec((H, W), lambda bi, ci: (0, 0)),            # A, resident
                pl.BlockSpec((bt, W, tn), lambda bi, ci: (bi, 0, ci)),  # x tile
            ],
            out_specs=pl.BlockSpec((bt, H, tn), lambda bi, ci: (bi, 0, ci)),
        ),
        compiler_params=pltpu.CompilerParams(
            dimension_semantics=("parallel", "parallel"),
            vmem_limit_bytes=vmem_limit_bytes,
        ),
        cost_estimate=cost,
    )(A, x)


if __name__ == "__main__":
    # Small deterministic inputs: B=2 batches, N=16 graph nodes, C=32 channels.
    key = jax.random.PRNGKey(0)
    k_a, k_x = jax.random.split(key)

    B, N, C = 2, 16, 32
    A = jax.random.normal(k_a, (N, N), dtype=jnp.float32)
    x = jax.random.normal(k_x, (B, N, C), dtype=jnp.float32)

    out = jax.block_until_ready(static_gconv(A, x))

    # Reference check against plain-JAX einsum (same semantics as torch.einsum).
    ref = jnp.einsum("hw,bwc->bhc", A, x)
    assert out.shape == (B, N, C)
    assert jnp.allclose(out, ref, atol=1e-5, rtol=1e-5)

    print("KERNEL_OK")
</pallas_src>

<mosaic_0001>
module attributes {stable_mosaic.version = 11 : i64} {
  func.func @_static_gconv_kernel(%arg0: i32, %arg1: i32, %arg2: memref<16x16xf32, #tpu.memory_space<vmem>>, %arg3: memref<1x16x32xf32, #tpu.memory_space<vmem>>, %arg4: memref<1x16x32xf32, #tpu.memory_space<vmem>>) attributes {dimension_semantics = [#tpu.dimension_semantics<parallel>, #tpu.dimension_semantics<parallel>], iteration_bounds = array<i64: 2, 1>, scalar_prefetch = 0 : i64, scratch_operands = 0 : i64, tpu.core_type = #tpu.core_type<tc>, window_params = [{pipeline_mode = #tpu.pipeline_mode<synchronous>, transform_indices = @transform_0, window_bounds = array<i64: 16, 16>}, {transform_indices = @transform_1, window_bounds = array<i64: 1, 16, 32>}, {transform_indices = @transform_2, window_bounds = array<i64: 1, 16, 32>}]} {
    %c0 = arith.constant 0 : index
    %c0_0 = arith.constant 0 : index
    %0 = vector.load %arg2[%c0, %c0_0] : memref<16x16xf32, #tpu.memory_space<vmem>>, vector<16x16xf32>
    %c0_i32 = arith.constant 0 : i32
    %1 = arith.index_cast %c0_i32 : i32 to index
    %c0_1 = arith.constant 0 : index
    %c0_2 = arith.constant 0 : index
    %2 = vector.load %arg3[%1, %c0_1, %c0_2] : memref<1x16x32xf32, #tpu.memory_space<vmem>>, vector<1x16x32xf32>
    %3 = vector.shape_cast %2 : vector<1x16x32xf32> to vector<16x32xf32>
    %cst = arith.constant dense<0.000000e+00> : vector<16x32xf32>
    %4 = tpu.matmul %0, %3, %cst {dimension_numbers = #tpu.dot_dimension_numbers<[1], [0], [0], [1], [0, 0, 1, 1], [], []>} : vector<16x16xf32>, vector<16x32xf32>, vector<16x32xf32> -> vector<16x32xf32>
    %5 = arith.index_cast %c0_i32 : i32 to index
    %c0_3 = arith.constant 0 : index
    %c0_4 = arith.constant 0 : index
    %6 = vector.load %arg4[%5, %c0_3, %c0_4] : memref<1x16x32xf32, #tpu.memory_space<vmem>>, vector<1x16x32xf32>
    %7 = vector.shape_cast %6 : vector<1x16x32xf32> to vector<16x32xf32>
    %8 = vector.shape_cast %4 : vector<16x32xf32> to vector<1x16x32xf32>
    tpu.vector_store %arg4[%5, %c0_3, %c0_4], %8 {strides = array<i32>} : memref<1x16x32xf32, #tpu.memory_space<vmem>>, vector<1x16x32xf32>,
    %c1_i32 = arith.constant 1 : i32
    return
  }
  func.func @transform_0(%arg0: i32, %arg1: i32) -> (i32, i32) {
    %c0_i32 = arith.constant 0 : i32
    %c0_i32_0 = arith.constant 0 : i32
    %c0_i32_1 = arith.constant 0 : i32
    return %c0_i32, %c0_i32_0 : i32, i32
  }
  func.func @transform_1(%arg0: i32, %arg1: i32) -> (i32, i32, i32) {
    %c0_i32 = arith.constant 0 : i32
    %c0_i32_0 = arith.constant 0 : i32
    return %arg0, %c0_i32, %arg1 : i32, i32, i32
  }
  func.func @transform_2(%arg0: i32, %arg1: i32) -> (i32, i32, i32) {
    %c0_i32 = arith.constant 0 : i32
    %c0_i32_0 = arith.constant 0 : i32
    return %arg0, %c0_i32, %arg1 : i32, i32, i32
  }
}

</mosaic_0001>

<llo_original>
// kernel: tpu_custom_call.1
$region0: #{tpu_custom_call.1}
  #allocation0 [shape = 'u32[]', space=smem, size = 0x4, offset = 0x4, fixed_abs, tag = 'smem constant byte address 0x4 - core index']
  #allocation1 [shape = 'u32[72,128]{1,0:T(1,128)}', space=vmem, size = 0x9000, scoped, tag = 'internal scratch']
  %s0 = inlined_call_operand.hbm [shape: f32[16,16], index: 0, kind: input, shape index: {}]
  %s1 = inlined_call_operand.hbm [shape: f32[2,16,32], index: 1, kind: input, shape index: {}]
  %s2 = inlined_call_operand.hbm [shape: f32[2,16,32], index: 2, kind: output, shape index: {}]
  %s3 = sld [smem:[#allocation0]]
  $region49: #{tpu_custom_call.1} parent=0
    _
  %s5 = ssub.s32 1, %s3
  %s6 = scalar_select 0, %s5, %s3
  $region1: #{tpu_custom_call.1} parent=0
    #allocation2 [shape = 'u8[8192]{0}', space=vmem, size = 0x2000, scoped, tag = 'input window, operand 0, single buffered']
    #allocation3 [shape = 's32[2]{0}', space=sflag, size = 0x8, scoped, tag = 'scoped memory for tpu_custom_call.1']
    #allocation4 [shape = 's32[2]{0}', space=sflag, size = 0x8, scoped, tag = 'scoped memory for tpu_custom_call.1']
    #allocation5 [shape = 'u8[16384]{0}', space=vmem, size = 0x4000, scoped, tag = 'input window, operand 1']
    #allocation6 [shape = 's32[2]{0}', space=sflag, size = 0x8, scoped, tag = 'scoped memory for tpu_custom_call.1']
    #allocation7 [shape = 'u8[16384]{0}', space=vmem, size = 0x4000, scoped, tag = 'output window, operand 0']
    %7 = vsyncpa [#allocation3], 0
    %8 = vsyncpa [#allocation6], 0
    %s9 = scalar_lea.sflag [#allocation6], 1
    %10 = vsyncpa %s9, 0
    %11 = vsyncpa [#allocation4], 0
    %s12 = scalar_lea.sflag [#allocation4], 1
    %13 = vsyncpa %s12, 0
    loop: start=0, step=1, limit=4
    $region2: #{tpu_custom_call.1} parent=1 // loop_pre_header
      _
    $region3: #{tpu_custom_call.1} parent=1 // loop_header
      %s15 = sphi 0, %s19
      %p16 = scmp.ge.s32.totalorder %s15, 4
      %s22 = sphi 0, %s34
      %s23 = sphi 0, %s30
      %s24 = sphi 0, %s22
      %s25 = sphi 0, %s23
      %s26 = sphi 0, %s24
      %s27 = sphi 0, %s25
      %s35 = sphi 0, %s35
      %s37 = sphi 0, %s35
      %s38 = sphi 0, %s37
      %s52 = sphi 0, %s38
      %s60 = sphi 0, %s62
      %s63 = sphi 0, %s60
      %s64 = sphi 0, %s63
      %s80 = sphi 0, %s64
      %s88 = sphi 0, %s90
      %s91 = sphi 0, %s88
      %s92 = sphi 0, %s91
      %s108 = sphi 0, %s92
    $region4: #{tpu_custom_call.1} parent=1 // loop_header_branch
      %18 = sbr.rel (%p16) target = $region8
    $region5: #{tpu_custom_call.1} parent=1 // loop_body
      %s20 = ssub.s32 %s15, 1
      %s21 = ssub.s32 %s15, 2
      %s28 = sadd.s32 1, %s23
      %p29 = scmp.ge.s32.totalorder %s28, 1
      %s30 = scalar_select %p29, 0, %s28
      %s31 = sadd.s32 1, %s22
      %s32 = scalar_select %p29, %s31, %s22
      %p33 = scmp.ge.s32.totalorder %s32, 2
      %s34 = scalar_select %p33, 0, %s32
      %s36 = sadd.s32 %s35, 1
      %p39 = scmp.eq.s32.totalorder %s15, 1
      %p40 = scmp.ne.s32.totalorder %s35, %s37
      %p41 = scmp.eq.s32.totalorder %s15, 0
      %p42 = por %p40, %p41
      %p43 = scmp.ne.s32.totalorder %s35, %s37
      %p44 = scmp.eq.s32.totalorder %s20, 1
      %p45 = por %p43, %p44
      %p46 = scmp.ne.s32.totalorder %s37, %s38
      %p47 = scmp.eq.s32.totalorder %s20, 0
      %p48 = por %p46, %p47
      %p49 = scmp.ne.s32.totalorder %s37, %s38
      %p50 = scmp.eq.s32.totalorder %s21, 1
      %p51 = por %p49, %p50
      %p53 = scmp.ne.s32.totalorder %s38, %s52
      %p54 = scmp.eq.s32.totalorder %s21, 0
      %p55 = por %p53, %p54
      %s56 = ssub.s32 %s22, %s34
      %s57 = ssub.s32 %s23, %s30
      %s58 = sor.u32 %s56, %s57
      %p59 = scmp.eq.s32.totalorder %s58, 0
      %s61 = sadd.s32 %s60, 1
      %s62 = scalar_select %p59, %s60, %s61
      %p65 = pneg %p59
      %p66 = scmp.eq.s32.totalorder %s15, 1
      %p67 = por %p65, %p66
      %p68 = scmp.ne.s32.totalorder %s60, %s63
      %p69 = scmp.eq.s32.totalorder %s15, 0
      %p70 = por %p68, %p69
      %p71 = scmp.ne.s32.totalorder %s60, %s63
      %p72 = scmp.eq.s32.totalorder %s20, 1
      %p73 = por %p71, %p72
      %p74 = scmp.ne.s32.totalorder %s63, %s64
      %p75 = scmp.eq.s32.totalorder %s20, 0
      %p76 = por %p74, %p75
      %p77 = scmp.ne.s32.totalorder %s63, %s64
      %p78 = scmp.eq.s32.totalorder %s21, 1
      %p79 = por %p77, %p78
      %p81 = scmp.ne.s32.totalorder %s64, %s80
      %p82 = scmp.eq.s32.totalorder %s21, 0
      %p83 = por %p81, %p82
      %s84 = ssub.s32 %s22, %s34
      %s85 = ssub.s32 %s23, %s30
      %s86 = sor.u32 %s84, %s85
      %p87 = scmp.eq.s32.totalorder %s86, 0
      %s89 = sadd.s32 %s88, 1
      %s90 = scalar_select %p87, %s88, %s89
      %p93 = pneg %p87
      %p94 = scmp.eq.s32.totalorder %s15, 1
      %p95 = por %p93, %p94
      %p96 = scmp.ne.s32.totalorder %s88, %s91
      %p97 = scmp.eq.s32.totalorder %s15, 0
      %p98 = por %p96, %p97
      %p99 = scmp.ne.s32.totalorder %s88, %s91
      %p100 = scmp.eq.s32.totalorder %s20, 1
      %p101 = por %p99, %p100
      %p102 = scmp.ne.s32.totalorder %s91, %s92
      %p103 = scmp.eq.s32.totalorder %s20, 0
      %p104 = por %p102, %p103
      %p105 = scmp.ne.s32.totalorder %s91, %s92
      %p106 = scmp.eq.s32.totalorder %s21, 1
      %p107 = por %p105, %p106
      %p109 = scmp.ne.s32.totalorder %s92, %s108
      %p110 = scmp.eq.s32.totalorder %s21, 0
      %p111 = por %p109, %p110
      %p112 = scmp.le.s32.totalorder 1, %s15
      %p113 = scmp.lt.s32.totalorder %s15, 3
      %p114 = pnand %p112, %p113
      %p115 = pneg %p114
      // Predicated region
      $region9: #{tpu_custom_call.1} parent=5 // pred_check
        _
      $region10: #{tpu_custom_call.1} parent=5 // pred_check_branch
        %117 = sbr.rel (%p114) target = $region12
      $region11: #{tpu_custom_call.1} parent=5 // pred_region
        %s118 = ssub.s32 %s15, 1
        // Predicated region
        $region13: #{tpu_custom_call.1} parent=11 // pred_check
          %p119 = pneg %p48
        $region14: #{tpu_custom_call.1} parent=11 // pred_check_branch
          %121 = sbr.rel (%p119) target = $region16
        $region15: #{tpu_custom_call.1} parent=11 // pred_region
          %123 = vsyncadd [#allocation3], 0
          %s124 = sshll.u32 %s0, 4
          %s125 = int_to_ptr.hbm [resolvable:$true] %s124
          %s126 = sshll.u32 [#allocation2], 4
          %s127 = int_to_ptr.vmem [resolvable:$true] %s126
          %132 = dma.hbm_to_vmem [thread:$0]  %s125, 256, %s127, [#allocation3], 128, 128, 8
        $region16: #{tpu_custom_call.1} parent=11 // pred_fallthru
          _
      $region12: #{tpu_custom_call.1} parent=5 // pred_fallthru
        _
      %p133 = scmp.lt.s32.totalorder %s15, 2
      // Predicated region
      $region17: #{tpu_custom_call.1} parent=5 // pred_check
        %p134 = pneg %p133
      $region18: #{tpu_custom_call.1} parent=5 // pred_check_branch
        %136 = sbr.rel (%p134) target = $region20
      $region19: #{tpu_custom_call.1} parent=5 // pred_region
        // Predicated region
        $region21: #{tpu_custom_call.1} parent=19 // pred_check
          %p137 = pneg %p70
        $region22: #{tpu_custom_call.1} parent=19 // pred_check_branch
          %139 = sbr.rel (%p137) target = $region24
        $region23: #{tpu_custom_call.1} parent=19 // pred_region
          %s140 = sand.u32 %s60, 1
          %s141 = scalar_lea.sflag [#allocation6], %s140
          %s142 = sand.u32 %s60, 1
          %s143 = smul.addr %s142, 16
          %s144 = scalar_lea.vmem [#allocation5], %s143
          %146 = vsyncadd %s141, 0
          %s147 = smul.addr %s22, 2
          %s148 = sadd.s32 %s23, %s147
          %s149 = smul.addr %s148, 8
          %s150 = scalar_lea.hbm %s1, %s149
          %s151 = sshll.u32 %s150, 4
          %s152 = int_to_ptr.hbm [resolvable:$true] %s151
          %s153 = sshll.u32 %s144, 4
          %s154 = int_to_ptr.vmem [resolvable:$true] %s153
          %159 = dma.hbm_to_vmem [thread:$0]  %s152, 256, %s154, %s141, 128, 128, 8
        $region24: #{tpu_custom_call.1} parent=19 // pred_fallthru
          _
      $region20: #{tpu_custom_call.1} parent=5 // pred_fallthru
        _
      %p160 = scmp.le.s32.totalorder 1, %s15
      %p161 = scmp.lt.s32.totalorder %s15, 3
      %p162 = pnand %p160, %p161
      %p163 = pneg %p162
      // Predicated region
      $region25: #{tpu_custom_call.1} parent=5 // pred_check
        _
      $region26: #{tpu_custom_call.1} parent=5 // pred_check_branch
        %165 = sbr.rel (%p162) target = $region28
      $region27: #{tpu_custom_call.1} parent=5 // pred_region
        %s166 = ssub.s32 %s15, 1
        // Predicated region
        $region29: #{tpu_custom_call.1} parent=27 // pred_check
          %p167 = pneg %p48
        $region30: #{tpu_custom_call.1} parent=27 // pred_check_branch
          %169 = sbr.rel (%p167) target = $region32
        $region31: #{tpu_custom_call.1} parent=27 // pred_region
          %171 = dma.done [#allocation3], 256
        $region32: #{tpu_custom_call.1} parent=27 // pred_fallthru
          _
        %s172 = sand.u32 %s63, 1
        %s173 = scalar_lea.sflag [#allocation6], %s172
        %s174 = sand.u32 %s63, 1
        %s175 = smul.addr %s174, 16
        %s176 = scalar_lea.vmem [#allocation5], %s175
        // Predicated region
        $region33: #{tpu_custom_call.1} parent=27 // pred_check
          %p177 = pneg %p76
        $region34: #{tpu_custom_call.1} parent=27 // pred_check_branch
          %179 = sbr.rel (%p177) target = $region36
        $region35: #{tpu_custom_call.1} parent=27 // pred_region
          %181 = dma.done %s173, 256
        $region36: #{tpu_custom_call.1} parent=27 // pred_fallthru
          _
        %p182 = pneg %p48
        %p183 = pneg %p45
        %s184 = sand.u32 %s63, 1
        %s185 = scalar_lea.sflag [#allocation6], %s184
        %s186 = sand.u32 %s63, 1
        %s187 = smul.addr %s186, 16
        %s188 = scalar_lea.vmem [#allocation5], %s187
        %p189 = pneg %p76
        %p190 = pneg %p73
        %p191 = pneg %p104
        %p192 = pneg %p101
        %s193 = sand.u32 %s91, 1
        %s194 = scalar_lea.sflag [#allocation4], %s193
        %s195 = sand.u32 %s91, 1
        %s196 = smul.addr %s195, 16
        %s197 = scalar_lea.vmem [#allocation7], %s196
        %v198 = vld [vmem:[#allocation2] sm:$0xff]
        %v199 = vld [vmem:[#allocation2 + $0x8] sm:$0xff]
        %v200 = vld [vmem:[%s176] sm:$0xff]
        %v201 = vld [vmem:[%s176 + $0x8] sm:$0xff]
        %vm202 = vcmask 130048
        %v204 = vsel %vm202, %v198, 0
        %v207 = vsel %vm202, %v199, 0
        %209 = vmatpush.msra.mxu0 0.0
        %210 = vmatpush.msra.mxu0 0.0
        %211 = vmatpush.msra.mxu0 0.0
        %212 = vmatpush.msra.mxu0 0.0
        %213 = vmatpush.msra.mxu0 0.0
        %214 = vmatpush.msra.mxu0 0.0
        %215 = vmatpush.msra.mxu0 0.0
        %216 = vmatpush.msra.mxu0 0.0
        %217 = vmatpush.msra.mxu0 0.0
        %218 = vmatpush.msra.mxu0 0.0
        %219 = vmatpush.msra.mxu0 0.0
        %220 = vmatpush.msra.mxu0 0.0
        %221 = vmatpush.msra.mxu0 0.0
        %222 = vmatpush.msra.mxu0 0.0
        %223 = vmatpush.msra.mxu0 %v201
        %224 = vmatpush.msra.mxu0 %v200
        %225 = vmatmul.f32.gmra.mxu0 %v204
        %v226 = vpop.f32.mrf.mxu0
        %v227 = vadd.f32 0.0, %v226
        %228 = vmatmul.f32.gmra.mxu0 %v207
        %v229 = vpop.f32.mrf.mxu0
        %v230 = vadd.f32 0.0, %v229
        %231 = vdwg.mxu0
        %vm232 = vcmask 261120
        %233 = vst.msk [vmem:[%s197] sm:$0xff] %vm232, %v227
        %234 = vst.msk [vmem:[%s197 + $0x8] sm:$0xff] %vm232, %v230
        %s235 = sand.u32 %s91, 1
        %s236 = scalar_lea.sflag [#allocation4], %s235
        %s237 = sand.u32 %s91, 1
        %s238 = smul.addr %s237, 16
        %s239 = scalar_lea.vmem [#allocation7], %s238
        // Predicated region
        $region37: #{tpu_custom_call.1} parent=27 // pred_check
          %p240 = pneg %p101
        $region38: #{tpu_custom_call.1} parent=27 // pred_check_branch
          %242 = sbr.rel (%p240) target = $region40
        $region39: #{tpu_custom_call.1} parent=27 // pred_region
          %244 = vsyncadd %s236, 0
          %s245 = smul.addr %s24, 2
          %s246 = sadd.s32 %s25, %s245
          %s247 = smul.addr %s246, 8
          %s248 = scalar_lea.hbm %s2, %s247
          %s249 = sshll.u32 %s239, 4
          %s250 = int_to_ptr.vmem [resolvable:$true] %s249
          %s251 = sshll.u32 %s248, 4
          %s252 = int_to_ptr.hbm [resolvable:$true] %s251
          %257 = dma.vmem_to_hbm [thread:$0]  %s250, 256, %s252, %s236, 128, 128, 8
        $region40: #{tpu_custom_call.1} parent=27 // pred_fallthru
          _
      $region28: #{tpu_custom_call.1} parent=5 // pred_fallthru
        _
      %p258 = scmp.le.s32.totalorder 2, %s15
      // Predicated region
      $region41: #{tpu_custom_call.1} parent=5 // pred_check
        %p259 = pneg %p258
      $region42: #{tpu_custom_call.1} parent=5 // pred_check_branch
        %261 = sbr.rel (%p259) target = $region44
      $region43: #{tpu_custom_call.1} parent=5 // pred_region
        %s262 = ssub.s32 %s15, 2
        // Predicated region
        $region45: #{tpu_custom_call.1} parent=43 // pred_check
          %p263 = pneg %p107
        $region46: #{tpu_custom_call.1} parent=43 // pred_check_branch
          %265 = sbr.rel (%p263) target = $region48
        $region47: #{tpu_custom_call.1} parent=43 // pred_region
          %s266 = sand.u32 %s92, 1
          %s267 = scalar_lea.sflag [#allocation4], %s266
          %s268 = sand.u32 %s92, 1
          %s269 = smul.addr %s268, 16
          %s270 = scalar_lea.vmem [#allocation7], %s269
          %272 = dma.done %s267, 256
        $region48: #{tpu_custom_call.1} parent=43 // pred_fallthru
          _
      $region44: #{tpu_custom_call.1} parent=5 // pred_fallthru
        _
    $region6: #{tpu_custom_call.1} parent=1 // loop_footer
      %s19 = sadd.s32 1, %s15
    $region7: #{tpu_custom_call.1} parent=1 // loop_footer_branch
      %14 = sbr.rel target = $region3
    $region8: #{tpu_custom_call.1} parent=1 // loop_exit
      _
    %273 = vsyncpa [#allocation3], 1
    %s274 = scalar_lea.sflag [#allocation3], 1
    %275 = vsyncpa %s274, 1
    %276 = vsyncpa [#allocation6], 1
    %s277 = scalar_lea.sflag [#allocation6], 1
    %278 = vsyncpa %s277, 1
    %279 = vsyncpa [#allocation4], 1
    %s280 = scalar_lea.sflag [#allocation4], 1
    %281 = vsyncpa %s280, 1

</llo_original>
